<compile_context>
chip_gen: v5e
topology: v5e:2x2
jax: 0.10.0
libtpu: 0.0.40
codegen_flags: <defaults>
</compile_context>

<pallas_src>
import functools

import jax
import jax.numpy as jnp
from jax import lax
from jax.experimental import pallas as pl
from jax.experimental.pallas import tpu as pltpu


_MASK_VALUE = -1e30
_VMEM_LIMIT_BYTES = 48 * 1024 * 1024  # safe scoped-VMEM limit on v5e/v6e/v7x


def _round_up(x, m):
    return (x + m - 1) // m * m


def _logits_kernel(x_ref, w_ref, b_ref, logits_ref, lse_ref, m_sc, l_sc,
                   *, tn, valid_v, need_mask):
    """One (TM, TN) logits tile + online logsumexp over the vocab axis.

    x_ref:      (TM, H)   bf16  VMEM
    w_ref:      (H, TN)   bf16  VMEM
    b_ref:      (1, TN)   f32   VMEM
    logits_ref: (TM, TN)  f32   VMEM (raw logits out)
    lse_ref:    (TM, 1)   f32   VMEM (written on last vocab tile)
    m_sc, l_sc: (TM, 1)   f32   scratch (running max / running sum of exp)
    """
    j = pl.program_id(1)

    @pl.when(j == 0)
    def _():
        m_sc[...] = jnp.full(m_sc.shape, -jnp.inf, dtype=m_sc.dtype)
        l_sc[...] = jnp.zeros(l_sc.shape, dtype=l_sc.dtype)

    # MXU matmul: bf16 inputs, f32 accumulation; bias added once per tile in f32.
    logits = jnp.dot(x_ref[...], w_ref[...], preferred_element_type=jnp.float32)
    logits = logits + b_ref[...]

    if need_mask:
        # Mask padded vocab columns so they don't contribute to the logsumexp.
        col = j * tn + lax.broadcasted_iota(jnp.int32, logits.shape, 1)
        logits = jnp.where(col < valid_v, logits, _MASK_VALUE)

    # Online logsumexp update (exact under vocab tiling).
    m_prev = m_sc[...]
    m_new = jnp.maximum(m_prev, jnp.max(logits, axis=-1, keepdims=True))
    l_sc[...] = (l_sc[...] * jnp.exp(m_prev - m_new)
                 + jnp.sum(jnp.exp(logits - m_new), axis=-1, keepdims=True))
    m_sc[...] = m_new

    logits_ref[...] = logits

    @pl.when(j == pl.num_programs(1) - 1)
    def _():
        lse_ref[...] = m_sc[...] + jnp.log(l_sc[...])


def _finalize_kernel(logits_ref, lse_ref, o_ref):
    """Elementwise: log_softmax = logits - logsumexp (per row)."""
    o_ref[...] = logits_ref[...] - lse_ref[...]


def masked_language_model(x, weight, bias, *, compute_dtype=jnp.bfloat16):
    """log_softmax(x @ weight + bias, axis=-1).

    x:      (B, S, H) f32
    weight: (H, V)    f32 (transpose of nn.Linear's (V, H) weight)
    bias:   (V,)      f32
    returns (B, S, V) f32
    """
    B, S, H = x.shape
    Hw, V = weight.shape
    assert H == Hw
    rows = B * S

    # Tile sizes: lane-dense vocab tiles (multiple of 128), row tiles multiple of 8.
    tm = 256 if rows >= 256 else _round_up(rows, 8)
    tn = 512 if V >= 512 else _round_up(V, 128)
    rows_p = _round_up(rows, tm)
    v_p = _round_up(V, tn)
    n_m = rows_p // tm
    n_n = v_p // tn

    x2d = x.reshape(rows, H).astype(compute_dtype)
    w = weight.astype(compute_dtype)
    b2d = bias.astype(jnp.float32).reshape(1, V)
    if rows_p != rows:
        x2d = jnp.pad(x2d, ((0, rows_p - rows), (0, 0)))
    if v_p != V:
        w = jnp.pad(w, ((0, 0), (0, v_p - V)))
        b2d = jnp.pad(b2d, ((0, 0), (0, v_p - V)))

    kernel = functools.partial(
        _logits_kernel, tn=tn, valid_v=V, need_mask=(v_p != V))

    # Pass 1: raw logits + per-row logsumexp.
    logits, lse = pl.pallas_call(
        kernel,
        out_shape=(
            jax.ShapeDtypeStruct((rows_p, v_p), jnp.float32),
            jax.ShapeDtypeStruct((rows_p, 1), jnp.float32),
        ),
        grid=(n_m, n_n),
        in_specs=[
            pl.BlockSpec((tm, H), lambda i, j: (i, 0)),   # x rows tile (full H)
            pl.BlockSpec((H, tn), lambda i, j: (0, j)),   # weight vocab tile
            pl.BlockSpec((1, tn), lambda i, j: (0, j)),   # bias vocab tile
        ],
        out_specs=[
            pl.BlockSpec((tm, tn), lambda i, j: (i, j)),  # raw logits tile
            pl.BlockSpec((tm, 1), lambda i, j: (i, 0)),   # logsumexp (revisited over j)
        ],
        scratch_shapes=[
            pltpu.VMEM((tm, 1), jnp.float32),  # running max
            pltpu.VMEM((tm, 1), jnp.float32),  # running sum of exp
        ],
        compiler_params=pltpu.CompilerParams(
            dimension_semantics=("parallel", "arbitrary"),
            vmem_limit_bytes=_VMEM_LIMIT_BYTES,
        ),
    )(x2d, w, b2d)

    # Pass 2: subtract the logsumexp, in place on the logits buffer.
    out = pl.pallas_call(
        _finalize_kernel,
        out_shape=jax.ShapeDtypeStruct((rows_p, v_p), jnp.float32),
        grid=(n_m, n_n),
        in_specs=[
            pl.BlockSpec((tm, tn), lambda i, j: (i, j)),
            pl.BlockSpec((tm, 1), lambda i, j: (i, 0)),
        ],
        out_specs=pl.BlockSpec((tm, tn), lambda i, j: (i, j)),
        input_output_aliases={0: 0},
        compiler_params=pltpu.CompilerParams(
            dimension_semantics=("parallel", "parallel"),
            vmem_limit_bytes=_VMEM_LIMIT_BYTES,
        ),
    )(logits, lse)

    return out[:rows, :V].reshape(B, S, V)


if __name__ == "__main__":
    # Small shapes consistent with the module: batch=2, seq=8, hidden=32, vocab=128.
    B, S, H, V = 2, 8, 32, 128

    key = jax.random.PRNGKey(0)
    k_x, k_w, k_b = jax.random.split(key, 3)

    bound = 1.0 / (H ** 0.5)
    x = jax.random.normal(k_x, (B, S, H), dtype=jnp.float32)
    weight = jax.random.uniform(k_w, (H, V), minval=-bound, maxval=bound, dtype=jnp.float32)
    bias = jax.random.uniform(k_b, (V,), minval=-bound, maxval=bound, dtype=jnp.float32)

    mlm = jax.jit(masked_language_model)
    out = mlm(x, weight, bias)
    out = jax.block_until_ready(out)

    # Reference with matching matmul precision (bf16 inputs, f32 accumulation + f32 softmax).
    logits_ref = jnp.dot(
        x.reshape(-1, H).astype(jnp.bfloat16),
        weight.astype(jnp.bfloat16),
        preferred_element_type=jnp.float32,
    ) + bias
    ref = jax.nn.log_softmax(logits_ref, axis=-1).reshape(B, S, V)

    assert out.shape == (B, S, V)
    assert out.dtype == jnp.float32
    assert bool(jnp.all(jnp.isfinite(out)))
    max_err = float(jnp.max(jnp.abs(out - ref)))
    assert jnp.allclose(out, ref, atol=1e-4, rtol=1e-4), max_err

    print("KERNEL_OK")
</pallas_src>

<mosaic_0001>
module attributes {stable_mosaic.version = 11 : i64} {
  func.func @_finalize_kernel(%arg0: i32, %arg1: i32, %arg2: memref<16x128xf32, #tpu.memory_space<vmem>>, %arg3: memref<16x1xf32, #tpu.memory_space<vmem>>, %arg4: memref<16x128xf32, #tpu.memory_space<vmem>>) attributes {dimension_semantics = [#tpu.dimension_semantics<parallel>, #tpu.dimension_semantics<parallel>], iteration_bounds = array<i64: 1, 1>, scalar_prefetch = 0 : i64, scratch_operands = 0 : i64, tpu.core_type = #tpu.core_type<tc>, window_params = [{transform_indices = @transform_0, window_bounds = array<i64: 16, 128>}, {transform_indices = @transform_1, window_bounds = array<i64: 16, 1>}, {transform_indices = @transform_2, window_bounds = array<i64: 16, 128>}]} {
    %c0 = arith.constant 0 : index
    %c0_0 = arith.constant 0 : index
    %0 = vector.load %arg2[%c0, %c0_0] : memref<16x128xf32, #tpu.memory_space<vmem>>, vector<16x128xf32>
    %c0_1 = arith.constant 0 : index
    %c0_2 = arith.constant 0 : index
    %1 = vector.load %arg3[%c0_1, %c0_2] : memref<16x1xf32, #tpu.memory_space<vmem>>, vector<16x1xf32>
    %2 = vector.broadcast %1 : vector<16x1xf32> to vector<16x128xf32>
    %3 = arith.subf %0, %2 : vector<16x128xf32>
    %c0_3 = arith.constant 0 : index
    %c0_4 = arith.constant 0 : index
    %4 = vector.load %arg4[%c0_3, %c0_4] : memref<16x128xf32, #tpu.memory_space<vmem>>, vector<16x128xf32>
    tpu.vector_store %arg4[%c0_3, %c0_4], %3 {strides = array<i32>} : memref<16x128xf32, #tpu.memory_space<vmem>>, vector<16x128xf32>,
    return
  }
  func.func @transform_0(%arg0: i32, %arg1: i32) -> (i32, i32) {
    %c0_i32 = arith.constant 0 : i32
    return %arg0, %arg1 : i32, i32
  }
  func.func @transform_1(%arg0: i32, %arg1: i32) -> (i32, i32) {
    %c0_i32 = arith.constant 0 : i32
    %c0_i32_0 = arith.constant 0 : i32
    return %arg0, %c0_i32 : i32, i32
  }
  func.func @transform_2(%arg0: i32, %arg1: i32) -> (i32, i32) {
    %c0_i32 = arith.constant 0 : i32
    return %arg0, %arg1 : i32, i32
  }
}

module attributes {stable_mosaic.version = 11 : i64} {
  func.func @_logits_kernel(%arg0: i32, %arg1: i32, %arg2: memref<16x32xbf16, #tpu.memory_space<vmem>>, %arg3: memref<32x128xbf16, #tpu.memory_space<vmem>>, %arg4: memref<1x128xf32, #tpu.memory_space<vmem>>, %arg5: memref<16x128xf32, #tpu.memory_space<vmem>>, %arg6: memref<16x1xf32, #tpu.memory_space<vmem>>, %arg7: memref<16x1xf32, #tpu.memory_space<vmem>>, %arg8: memref<16x1xf32, #tpu.memory_space<vmem>>) attributes {dimension_semantics = [#tpu.dimension_semantics<parallel>, #tpu.dimension_semantics<arbitrary>], iteration_bounds = array<i64: 1, 1>, scalar_prefetch = 0 : i64, scratch_operands = 2 : i64, tpu.core_type = #tpu.core_type<tc>, window_params = [{transform_indices = @transform_0, window_bounds = array<i64: 16, 32>}, {transform_indices = @transform_1, window_bounds = array<i64: 32, 128>}, {transform_indices = @transform_2, window_bounds = array<i64: 1, 128>}, {transform_indices = @transform_3, window_bounds = array<i64: 16, 128>}, {transform_indices = @transform_4, window_bounds = array<i64: 16, 1>}]} {
    %c0_i32 = arith.constant 0 : i32
    %0 = arith.cmpi eq, %arg1, %c0_i32 : i32
    %1 = arith.extui %0 : i1 to i32
    %c0_i32_0 = arith.constant 0 : i32
    %2 = arith.cmpi ne, %1, %c0_i32_0 : i32
    scf.if %2 {
      %cst_20 = arith.constant 0xFF800000 : f32
      %29 = vector.broadcast %cst_20 : f32 to vector<16x1xf32>
      %c0_21 = arith.constant 0 : index
      %c0_22 = arith.constant 0 : index
      %30 = vector.load %arg7[%c0_21, %c0_22] : memref<16x1xf32, #tpu.memory_space<vmem>>, vector<16x1xf32>
      tpu.vector_store %arg7[%c0_21, %c0_22], %29 {strides = array<i32>} : memref<16x1xf32, #tpu.memory_space<vmem>>, vector<16x1xf32>,
      %cst_23 = arith.constant 0.000000e+00 : f32
      %31 = vector.broadcast %cst_23 : f32 to vector<16x1xf32>
      %c0_24 = arith.constant 0 : index
      %c0_25 = arith.constant 0 : index
      %32 = vector.load %arg8[%c0_24, %c0_25] : memref<16x1xf32, #tpu.memory_space<vmem>>, vector<16x1xf32>
      tpu.vector_store %arg8[%c0_24, %c0_25], %31 {strides = array<i32>} : memref<16x1xf32, #tpu.memory_space<vmem>>, vector<16x1xf32>,
    } else {
    }
    %c0 = arith.constant 0 : index
    %c0_1 = arith.constant 0 : index
    %3 = vector.load %arg2[%c0, %c0_1] : memref<16x32xbf16, #tpu.memory_space<vmem>>, vector<16x32xbf16>
    %c0_2 = arith.constant 0 : index
    %c0_3 = arith.constant 0 : index
    %4 = vector.load %arg3[%c0_2, %c0_3] : memref<32x128xbf16, #tpu.memory_space<vmem>>, vector<32x128xbf16>
    %cst = arith.constant dense<0.000000e+00> : vector<16x128xf32>
    %5 = tpu.matmul %3, %4, %cst {dimension_numbers = #tpu.dot_dimension_numbers<[1], [0], [0], [1], [0, 0, 1, 1], [], []>} : vector<16x32xbf16>, vector<32x128xbf16>, vector<16x128xf32> -> vector<16x128xf32>
    %c0_4 = arith.constant 0 : index
    %c0_5 = arith.constant 0 : index
    %6 = vector.load %arg4[%c0_4, %c0_5] : memref<1x128xf32, #tpu.memory_space<vmem>>, vector<1x128xf32>
    %7 = vector.broadcast %6 : vector<1x128xf32> to vector<16x128xf32>
    %8 = arith.addf %5, %7 : vector<16x128xf32>
    %c0_6 = arith.constant 0 : index
    %c0_7 = arith.constant 0 : index
    %9 = vector.load %arg7[%c0_6, %c0_7] : memref<16x1xf32, #tpu.memory_space<vmem>>, vector<16x1xf32>
    %cst_8 = arith.constant dense<0xFF800000> : vector<16xf32>
    %10 = vector.multi_reduction <maximumf>, %8, %cst_8 [1] : vector<16x128xf32> to vector<16xf32>
    %11 = vector.shape_cast %10 : vector<16xf32> to vector<16x1xf32>
    %12 = arith.maximumf %9, %11 : vector<16x1xf32>
    %c0_9 = arith.constant 0 : index
    %c0_10 = arith.constant 0 : index
    %13 = vector.load %arg8[%c0_9, %c0_10] : memref<16x1xf32, #tpu.memory_space<vmem>>, vector<16x1xf32>
    %14 = arith.subf %9, %12 : vector<16x1xf32>
    %15 = math.exp %14 : vector<16x1xf32>
    %16 = arith.mulf %13, %15 : vector<16x1xf32>
    %17 = vector.broadcast %12 : vector<16x1xf32> to vector<16x128xf32>
    %18 = arith.subf %8, %17 : vector<16x128xf32>
    %19 = math.exp %18 : vector<16x128xf32>
    %cst_11 = arith.constant dense<0.000000e+00> : vector<16xf32>
    %20 = vector.multi_reduction <add>, %19, %cst_11 [1] : vector<16x128xf32> to vector<16xf32>
    %21 = vector.shape_cast %20 : vector<16xf32> to vector<16x1xf32>
    %22 = arith.addf %16, %21 : vector<16x1xf32>
    %c0_12 = arith.constant 0 : index
    %c0_13 = arith.constant 0 : index
    %23 = vector.load %arg8[%c0_12, %c0_13] : memref<16x1xf32, #tpu.memory_space<vmem>>, vector<16x1xf32>
    tpu.vector_store %arg8[%c0_12, %c0_13], %22 {strides = array<i32>} : memref<16x1xf32, #tpu.memory_space<vmem>>, vector<16x1xf32>,
    %c0_14 = arith.constant 0 : index
    %c0_15 = arith.constant 0 : index
    %24 = vector.load %arg7[%c0_14, %c0_15] : memref<16x1xf32, #tpu.memory_space<vmem>>, vector<16x1xf32>
    tpu.vector_store %arg7[%c0_14, %c0_15], %12 {strides = array<i32>} : memref<16x1xf32, #tpu.memory_space<vmem>>, vector<16x1xf32>,
    %c0_16 = arith.constant 0 : index
    %c0_17 = arith.constant 0 : index
    %25 = vector.load %arg5[%c0_16, %c0_17] : memref<16x128xf32, #tpu.memory_space<vmem>>, vector<16x128xf32>
    tpu.vector_store %arg5[%c0_16, %c0_17], %8 {strides = array<i32>} : memref<16x128xf32, #tpu.memory_space<vmem>>, vector<16x128xf32>,
    %c0_i32_18 = arith.constant 0 : i32
    %26 = arith.cmpi eq, %arg1, %c0_i32_18 : i32
    %27 = arith.extui %26 : i1 to i32
    %c0_i32_19 = arith.constant 0 : i32
    %28 = arith.cmpi ne, %27, %c0_i32_19 : i32
    scf.if %28 {
      %c0_20 = arith.constant 0 : index
      %c0_21 = arith.constant 0 : index
      %29 = vector.load %arg7[%c0_20, %c0_21] : memref<16x1xf32, #tpu.memory_space<vmem>>, vector<16x1xf32>
      %c0_22 = arith.constant 0 : index
      %c0_23 = arith.constant 0 : index
      %30 = vector.load %arg8[%c0_22, %c0_23] : memref<16x1xf32, #tpu.memory_space<vmem>>, vector<16x1xf32>
      %31 = math.log %30 : vector<16x1xf32>
      %32 = arith.addf %29, %31 : vector<16x1xf32>
      %c0_24 = arith.constant 0 : index
      %c0_25 = arith.constant 0 : index
      %33 = vector.load %arg6[%c0_24, %c0_25] : memref<16x1xf32, #tpu.memory_space<vmem>>, vector<16x1xf32>
      tpu.vector_store %arg6[%c0_24, %c0_25], %32 {strides = array<i32>} : memref<16x1xf32, #tpu.memory_space<vmem>>, vector<16x1xf32>,
    } else {
    }
    return
  }
  func.func @transform_0(%arg0: i32, %arg1: i32) -> (i32, i32) {
    %c0_i32 = arith.constant 0 : i32
    %c0_i32_0 = arith.constant 0 : i32
    return %arg0, %c0_i32 : i32, i32
  }
  func.func @transform_1(%arg0: i32, %arg1: i32) -> (i32, i32) {
    %c0_i32 = arith.constant 0 : i32
    %c0_i32_0 = arith.constant 0 : i32
    return %c0_i32, %arg1 : i32, i32
  }
  func.func @transform_2(%arg0: i32, %arg1: i32) -> (i32, i32) {
    %c0_i32 = arith.constant 0 : i32
    %c0_i32_0 = arith.constant 0 : i32
    return %c0_i32, %arg1 : i32, i32
  }
  func.func @transform_3(%arg0: i32, %arg1: i32) -> (i32, i32) {
    %c0_i32 = arith.constant 0 : i32
    return %arg0, %arg1 : i32, i32
  }
  func.func @transform_4(%arg0: i32, %arg1: i32) -> (i32, i32) {
    %c0_i32 = arith.constant 0 : i32
    %c0_i32_0 = arith.constant 0 : i32
    return %arg0, %c0_i32 : i32, i32
  }
}

</mosaic_0001>

<llo_original>
// kernel: masked_language_model.3
$region0: #{masked_language_model.3}
  #allocation0 [shape = 'u32[]', space=smem, size = 0x4, offset = 0x4, fixed_abs, tag = 'smem constant byte address 0x4 - core index']
  #allocation1 [shape = 'u32[72,128]{1,0:T(1,128)}', space=vmem, size = 0x9000, scoped, tag = 'internal scratch']
  %s0 = inlined_call_operand.vmem [shape: f32[16,128], index: 0, kind: input, shape index: {}, may-alias: {0,2}]
  %s1 = inlined_call_operand.vmem [shape: f32[16,1], index: 1, kind: input, shape index: {}]
  %s2 = inlined_call_operand.vmem [shape: f32[16,128], index: 2, kind: output, shape index: {}, may-alias: {0,2}]
  %s3 = sld [smem:[#allocation0]]
  $region18: #{masked_language_model.3} parent=0
    _
  %s5 = ssub.s32 1, %s3
  %s6 = scalar_select 0, %s5, %s3
  // Predicated region
  $region2: #{masked_language_model.3} parent=0 // pred_check
    _
  $region3: #{masked_language_model.3} parent=0 // pred_check_branch
    %8 = sbr.rel (0) target = $region5
  $region4: #{masked_language_model.3} parent=0 // pred_region
    _
  $region5: #{masked_language_model.3} parent=0 // pred_fallthru
    _
  // Predicated region
  $region6: #{masked_language_model.3} parent=0 // pred_check
    _
  $region7: #{masked_language_model.3} parent=0 // pred_check_branch
    %10 = sbr.rel (0) target = $region9
  $region8: #{masked_language_model.3} parent=0 // pred_region
    _
  $region9: #{masked_language_model.3} parent=0 // pred_fallthru
    _
  %v11 = vld [vmem:[%s0] sm:$0xff]
  %v12 = vld [vmem:[%s0 + $0x8] sm:$0xff]
  %v13 = vld [vmem:[%s1] sm:$0xff]
  %v14 = vld [vmem:[%s1 + $0x8] sm:$0xff]
  %16 = vset.pattern.permute.xlu0 0
  %17 = vperm.xlu0 %16, %v13
  %v18 = vpop.permute.xlu0 %17
  %21 = vset.pattern.permute.xlu0 0
  %22 = vperm.xlu0 %21, %v14
  %v23 = vpop.permute.xlu0 %22
  %v25 = vsub.f32 %v11, %v18
  %v26 = vsub.f32 %v12, %v23
  %27 = vst [vmem:[%s2] sm:$0xff] %v25
  %28 = vst [vmem:[%s2 + $0x8] sm:$0xff] %v26
  // Predicated region
  $region10: #{masked_language_model.3} parent=0 // pred_check
    _
  $region11: #{masked_language_model.3} parent=0 // pred_check_branch
    %30 = sbr.rel (0) target = $region13
  $region12: #{masked_language_model.3} parent=0 // pred_region
    _
  $region13: #{masked_language_model.3} parent=0 // pred_fallthru
    _
  // Predicated region
  $region14: #{masked_language_model.3} parent=0 // pred_check
    _
  $region15: #{masked_language_model.3} parent=0 // pred_check_branch
    %32 = sbr.rel (0) target = $region17
  $region16: #{masked_language_model.3} parent=0 // pred_region
    _
  $region17: #{masked_language_model.3} parent=0 // pred_fallthru
    _

// kernel: masked_language_model.2
$region0: #{masked_language_model.2}
  #allocation0 [shape = 'u32[]', space=smem, size = 0x4, offset = 0x4, fixed_abs, tag = 'smem constant byte address 0x4 - core index']
  #allocation1 [shape = 'u32[72,128]{1,0:T(1,128)}', space=vmem, size = 0x9000, scoped, tag = 'internal scratch']
  #allocation2 [shape = 'f32[16,1]{1,0:T(8,128)}', space=vmem, size = 0x2000, scoped, tag = 'scratch operand']
  #allocation3 [shape = 'f32[16,1]{1,0:T(8,128)}', space=vmem, size = 0x2000, scoped, tag = 'scratch operand']
  %s0 = inlined_call_operand.vmem [shape: bf16[16,32], index: 0, kind: input, shape index: {}]
  %s1 = inlined_call_operand.vmem [shape: bf16[32,128], index: 1, kind: input, shape index: {}]
  %s2 = inlined_call_operand.vmem [shape: f32[1,128], index: 2, kind: input, shape index: {}]
  %s3 = inlined_call_operand.vmem [shape: f32[16,128], index: 3, kind: output, shape index: {0}]
  %s4 = inlined_call_operand.vmem [shape: f32[16,1], index: 4, kind: output, shape index: {1}]
  %5 = xla_tuple %s3, %s4
  %s6 = sld [smem:[#allocation0]]
  $region38: #{masked_language_model.2} parent=0
    _
  %s8 = ssub.s32 1, %s6
  %s9 = scalar_select 0, %s8, %s6
  // Predicated region
  $region2: #{masked_language_model.2} parent=0 // pred_check
    _
  $region3: #{masked_language_model.2} parent=0 // pred_check_branch
    %11 = sbr.rel (0) target = $region5
  $region4: #{masked_language_model.2} parent=0 // pred_region
    _
  $region5: #{masked_language_model.2} parent=0 // pred_fallthru
    _
  // Predicated region
  $region6: #{masked_language_model.2} parent=0 // pred_check
    _
  $region7: #{masked_language_model.2} parent=0 // pred_check_branch
    %13 = sbr.rel (0) target = $region9
  $region8: #{masked_language_model.2} parent=0 // pred_region
    _
  $region9: #{masked_language_model.2} parent=0 // pred_fallthru
    _
  // Predicated region
  $region10: #{masked_language_model.2} parent=0 // pred_check
    _
  $region11: #{masked_language_model.2} parent=0 // pred_check_branch
    %15 = sbr.rel (0) target = $region13
  $region12: #{masked_language_model.2} parent=0 // pred_region
    _
  $region13: #{masked_language_model.2} parent=0 // pred_fallthru
    _
  %p17 = scmp.eq.s32.totalorder 0, 0
  // Predicated region
  $region14: #{masked_language_model.2} parent=0 // pred_check
    %p18 = pneg %p17
  $region15: #{masked_language_model.2} parent=0 // pred_check_branch
    %20 = sbr.rel (%p18) target = $region17
  $region16: #{masked_language_model.2} parent=0 // pred_region
    %vm21 = vcmask 7168
    %22 = vst.msk [vmem:[#allocation2] sm:$0xff] %vm21, -inf
    %23 = vst.msk [vmem:[#allocation2 + $0x8] sm:$0xff] %vm21, -inf
    %24 = vst.msk [vmem:[#allocation3] sm:$0xff] %vm21, 0.0
    %25 = vst.msk [vmem:[#allocation3 + $0x8] sm:$0xff] %vm21, 0.0
  $region17: #{masked_language_model.2} parent=0 // pred_fallthru
    _
  %v26 = vld [vmem:[%s0] sm:$0xf]
  %v27 = vld [vmem:[%s0 + $0x4] sm:$0xf]
  %v28 = vld [vmem:[%s1] sm:$0xf]
  %v29 = vld [vmem:[%s1 + $0x4] sm:$0xf]
  %v30 = vld [vmem:[%s1 + $0x8] sm:$0xf]
  %v31 = vld [vmem:[%s1 + $0xc] sm:$0xf]
  %v32 = vld [vmem:[%s2] sm:$0x1]
  %v34 = vperm.slane %v32, 0
  %v38 = vunpack.c.l.b16 %v26
  %v39 = vunpack.c.l.b16 %v27
  %v40 = vpack.c.b16 %v39, %v38
  %v45 = vunpack.c.l.b16 %v28
  %v46 = vunpack.c.l.b16 %v29
  %v47 = vunpack.c.l.b16 %v30
  %v48 = vunpack.c.l.b16 %v31
  %v49 = vpack.c.b16 %v46, %v45
  %v50 = vpack.c.b16 %v48, %v47
  %vm53 = vcmask 261120
  %v55 = vsel %vm53, %v40, 0
  %57 = vmatpush.bf16.msra.mxu0 0
  %58 = vmatpush.bf16.msra.mxu0 0
  %59 = vmatpush.bf16.msra.mxu0 0
  %60 = vmatpush.bf16.msra.mxu0 0
  %61 = vmatpush.bf16.msra.mxu0 0
  %62 = vmatpush.bf16.msra.mxu0 0
  %63 = vmatpush.bf16.msra.mxu0 %v50
  %64 = vmatpush.bf16.msra.mxu0 %v49
  %65 = vmatmul.bf16.gmra.mxu0 %v55
  %v66 = vpop.f32.mrf.mxu0
  %v67 = vadd.f32 %v34, %v66
  %v68 = vpop.f32.mrf.mxu0
  %v69 = vadd.f32 %v34, %v68
  %70 = vdwg.mxu0
  %v71 = vld [vmem:[#allocation2] sm:$0xff]
  %v72 = vld [vmem:[#allocation2 + $0x8] sm:$0xff]
  %73 = vmax.xlane.f32.xlu0 %v67
  %v74 = vpop.xlane.xlu0 %73
  %75 = vmax.xlane.f32.xlu0 %v69
  %v76 = vpop.xlane.xlu0 %75
  %v77 = vmax.f32 %v71, %v74
  %v78 = vmax.f32 %v72, %v76
  %v79 = vld [vmem:[#allocation3] sm:$0xff]
  %v80 = vld [vmem:[#allocation3 + $0x8] sm:$0xff]
  %v81 = vsub.f32 %v71, %v77
  %v82 = vsub.f32 %v72, %v78
  %v83 = vmul.f32 %v81, 1.442695
  %v84 = vpow.pop %v83
  %v85 = vmul.f32 %v82, 1.442695
  %v86 = vpow.pop %v85
  %v87 = vmul.f32 %v79, %v84
  %v88 = vmul.f32 %v80, %v86
  %90 = vset.pattern.permute.xlu0 0
  %91 = vperm.xlu0 %90, %v77
  %v92 = vpop.permute.xlu0 %91
  %95 = vset.pattern.permute.xlu0 0
  %96 = vperm.xlu0 %95, %v78
  %v97 = vpop.permute.xlu0 %96
  %v99 = vsub.f32 %v67, %v92
  %v100 = vsub.f32 %v69, %v97
  %v101 = vmul.f32 %v99, 1.442695
  %v102 = vpow.pop %v101
  %v103 = vmul.f32 %v100, 1.442695
  %v104 = vpow.pop %v103
  %105 = vadd.xlane.f32.xlu0 %v102
  %v106 = vpop.xlane.xlu0 %105
  %107 = vadd.xlane.f32.xlu0 %v104
  %v108 = vpop.xlane.xlu0 %107
  %v109 = vadd.f32 %v87, %v106
  %v110 = vadd.f32 %v88, %v108
  %vm111 = vcmask 7168
  %112 = vst.msk [vmem:[#allocation3] sm:$0xff] %vm111, %v109
  %113 = vst.msk [vmem:[#allocation3 + $0x8] sm:$0xff] %vm111, %v110
  %114 = vst.msk [vmem:[#allocation2] sm:$0xff] %vm111, %v77
  %115 = vst.msk [vmem:[#allocation2 + $0x8] sm:$0xff] %vm111, %v78
  %116 = vst [vmem:[%s3] sm:$0xff] %v67
  %117 = vst [vmem:[%s3 + $0x8] sm:$0xff] %v69
  // Predicated region
  $region18: #{masked_language_model.2} parent=0 // pred_check
    %p118 = pneg %p17
  $region19: #{masked_language_model.2} parent=0 // pred_check_branch
    %120 = sbr.rel (%p118) target = $region21
  $region20: #{masked_language_model.2} parent=0 // pred_region
    %v121 = vld [vmem:[#allocation2] sm:$0xff]
    %v122 = vld [vmem:[#allocation2 + $0x8] sm:$0xff]
    %v123 = vld [vmem:[#allocation3] sm:$0xff]
    %v124 = vld [vmem:[#allocation3 + $0x8] sm:$0xff]
    %v125 = vlog2.pop %v123
    %v126 = vmul.f32 %v125, 0.6931472
    %v127 = vlog2.pop %v124
    %v128 = vmul.f32 %v127, 0.6931472
    %v129 = vadd.f32 %v121, %v126
    %v130 = vadd.f32 %v122, %v128
    %131 = vst.msk [vmem:[%s4] sm:$0xff] %vm111, %v129
    %132 = vst.msk [vmem:[%s4 + $0x8] sm:$0xff] %vm111, %v130
  $region21: #{masked_language_model.2} parent=0 // pred_fallthru
    _
  // Predicated region
  $region22: #{masked_language_model.2} parent=0 // pred_check
    _
  $region23: #{masked_language_model.2} parent=0 // pred_check_branch
    %134 = sbr.rel (0) target = $region25
  $region24: #{masked_language_model.2} parent=0 // pred_region
    _
  $region25: #{masked_language_model.2} parent=0 // pred_fallthru
    _
  // Predicated region
  $region26: #{masked_language_model.2} parent=0 // pred_check
    _
  $region27: #{masked_language_model.2} parent=0 // pred_check_branch
    %136 = sbr.rel (0) target = $region29
  $region28: #{masked_language_model.2} parent=0 // pred_region
    _
  $region29: #{masked_language_model.2} parent=0 // pred_fallthru
    _
  // Predicated region
  $region30: #{masked_language_model.2} parent=0 // pred_check
    _
  $region31: #{masked_language_model.2} parent=0 // pred_check_branch
    %138 = sbr.rel (0) target = $region33
  $region32: #{masked_language_model.2} parent=0 // pred_region
    _
  $region33: #{masked_language_model.2} parent=0 // pred_fallthru
    _
  // Predicated region
  $region34: #{masked_language_model.2} parent=0 // pred_check
    _
  $region35: #{masked_language_model.2} parent=0 // pred_check_branch
    %140 = sbr.rel (0) target = $region37
  $region36: #{masked_language_model.2} parent=0 // pred_region
    _
  $region37: #{masked_language_model.2} parent=0 // pred_fallthru
    _

</llo_original>
